<compile_context>
chip_gen: v7x
topology: tpu7x:2x2x1
jax: 0.10.0
libtpu: 0.0.40
codegen_flags: <defaults>
</compile_context>

<pallas_src>
import jax
import jax.numpy as jnp
from jax.experimental import pallas as pl
from jax.experimental.pallas import tpu as pltpu

_LANE = 128
_SUBLANE = 8


def _caf_kernel_vpu(b_ref, u_ref, o_ref):
    """Lane-dense small-qdim path.

    b_ref: (qdim, qdim) scalars in SMEM.
    u_ref: (qdim, TILE_N) in VMEM -- batch on lanes.
    o_ref: (qdim, TILE_N) in VMEM.
    out[i, n] = sum_j B[i, j] * u[j, n]
    """
    qdim = b_ref.shape[0]
    u = u_ref[...].astype(jnp.float32)              # (qdim, TILE_N)
    rows = []
    for i in range(qdim):                           # unrolled: qdim^2 VPU FMAs
        acc = b_ref[i, 0] * u[0:1, :]
        for j in range(1, qdim):
            acc = acc + b_ref[i, j] * u[j:j + 1, :]
        rows.append(acc)
    o_ref[...] = jnp.concatenate(rows, axis=0).astype(o_ref.dtype)


def _caf_kernel_mxu(b_ref, u_ref, o_ref):
    """MXU path for qdim >= 128 (row-major layout is already lane-dense).

    b_ref: (qdim, qdim), u_ref: (TILE_N, qdim), o_ref: (TILE_N, qdim).
    out[n, i] = sum_j u[n, j] * B[i, j]   (contract B's dim 1 -> no B.T)
    """
    o_ref[...] = jax.lax.dot_general(
        u_ref[...], b_ref[...],
        dimension_numbers=(((1,), (1,)), ((), ())),
        preferred_element_type=jnp.float32,
    ).astype(o_ref.dtype)


def control_affine_linear_force(B, q, v, u, *, tile_n=None):
    """Pallas implementation of ControlAffineLinearForce.forward.

    Args:
      B: (1, qdim, qdim) parameter.
      q: (N, qdim) generalized coordinates (shape-checked only).
      v: (N, qdim) generalized velocities (unused).
      u: (N, qdim) control input.

    Returns:
      F: (N, qdim, 1)
    """
    N, qdim = q.shape
    assert u.shape == (N, qdim), u.shape
    assert B.shape == (1, qdim, qdim), B.shape
    del v  # unused, matches the PyTorch module

    B2d = B.reshape(qdim, qdim)

    if qdim < _LANE:
        # ---- lane-dense VPU path: batch dim N on lanes ---------------------
        if tile_n is None:
            tile_n = 2048
        if tile_n >= N:
            tile_n = N                                # full extent -> legal block
        else:
            tile_n = max(_LANE, (tile_n // _LANE) * _LANE)
        grid = (pl.cdiv(N, tile_n),)

        u_t = u.T                                     # (qdim, N): wrapper layout plumbing
        out_t = pl.pallas_call(
            _caf_kernel_vpu,
            out_shape=jax.ShapeDtypeStruct((qdim, N), u.dtype),
            grid=grid,
            in_specs=[
                # B: small, resident scalars in SMEM (no MXU, no VMEM tile).
                pl.BlockSpec(memory_space=pltpu.MemorySpace.SMEM),
                pl.BlockSpec((qdim, tile_n), lambda i: (0, i)),
            ],
            out_specs=pl.BlockSpec((qdim, tile_n), lambda i: (0, i)),
            compiler_params=pltpu.CompilerParams(
                dimension_semantics=("parallel",)),
        )(B2d, u_t)
        out2d = out_t.T
    else:
        # ---- MXU path: qdim already fills the lane axis --------------------
        if tile_n is None:
            tile_n = 512
        # Keep double-buffered u/out tiles + resident B inside v7x VMEM with
        # headroom (budget ~8 MiB for the streamed tiles).
        budget_bytes = 8 * 1024 * 1024
        bytes_per_row = 4 * qdim * 4                  # u + out, double-buffered, f32
        tile_n = min(tile_n, max(_SUBLANE, budget_bytes // bytes_per_row))
        if tile_n >= N:
            tile_n = N
        else:
            tile_n = max(_SUBLANE, (tile_n // _SUBLANE) * _SUBLANE)
        grid = (pl.cdiv(N, tile_n),)

        out2d = pl.pallas_call(
            _caf_kernel_mxu,
            out_shape=jax.ShapeDtypeStruct((N, qdim), u.dtype),
            grid=grid,
            in_specs=[
                pl.BlockSpec((qdim, qdim), lambda i: (0, 0)),     # B resident
                pl.BlockSpec((tile_n, qdim), lambda i: (i, 0)),
            ],
            out_specs=pl.BlockSpec((tile_n, qdim), lambda i: (i, 0)),
            compiler_params=pltpu.CompilerParams(
                dimension_semantics=("parallel",)),
        )(B2d, u)

    return out2d.reshape(N, qdim, 1)


if __name__ == "__main__":
    key = jax.random.PRNGKey(0)
    k_b, k_q, k_v, k_u = jax.random.split(key, 4)

    # --- small-qdim (lane-dense VPU) path: N=256, qdim=4, two grid steps ---
    N, qdim = 256, 4
    B = (jnp.eye(qdim, dtype=jnp.float32) * 2.0
         + 0.1 * jax.random.normal(k_b, (qdim, qdim), dtype=jnp.float32)
         ).reshape(1, qdim, qdim)
    q = jax.random.normal(k_q, (N, qdim), dtype=jnp.float32)
    v = jax.random.normal(k_v, (N, qdim), dtype=jnp.float32)
    u = jax.random.normal(k_u, (N, qdim), dtype=jnp.float32)

    F = jax.block_until_ready(
        control_affine_linear_force(B, q, v, u, tile_n=128))
    F_ref = jnp.einsum("ij,nj->ni", B[0], u)[..., None]
    assert F.shape == (N, qdim, 1), F.shape
    assert jnp.allclose(F, F_ref, atol=1e-5, rtol=1e-5)

    # --- large-qdim (MXU) path: N=16, qdim=128 ------------------------------
    N2, qdim2 = 16, 128
    k_b2, k_q2, k_u2 = jax.random.split(k_b, 3)
    B2 = jax.random.normal(k_b2, (1, qdim2, qdim2), dtype=jnp.float32)
    q2 = jax.random.normal(k_q2, (N2, qdim2), dtype=jnp.float32)
    u2 = jax.random.normal(k_u2, (N2, qdim2), dtype=jnp.float32)

    F2 = jax.block_until_ready(control_affine_linear_force(B2, q2, q2, u2))
    F2_ref = jnp.einsum("ij,nj->ni", B2[0], u2)[..., None]
    assert F2.shape == (N2, qdim2, 1), F2.shape
    assert jnp.allclose(F2, F2_ref, atol=2e-2, rtol=2e-2)

    print("KERNEL_OK")
</pallas_src>

<mosaic_0001>
module attributes {stable_mosaic.version = 11 : i64} {
  func.func @_caf_kernel_vpu(%arg0: i32, %arg1: memref<4x4xf32, #tpu.memory_space<smem>>, %arg2: memref<4x128xf32, #tpu.memory_space<vmem>>, %arg3: memref<4x128xf32, #tpu.memory_space<vmem>>) attributes {dimension_semantics = [#tpu.dimension_semantics<parallel>], iteration_bounds = array<i64: 2>, scalar_prefetch = 0 : i64, scratch_operands = 0 : i64, tpu.core_type = #tpu.core_type<tc>, window_params = [{transform_indices = @transform_0, window_bounds = array<i64: 4, 4>}, {transform_indices = @transform_1, window_bounds = array<i64: 4, 128>}, {transform_indices = @transform_2, window_bounds = array<i64: 4, 128>}]} {
    %c0 = arith.constant 0 : index
    %c0_0 = arith.constant 0 : index
    %0 = vector.load %arg2[%c0, %c0_0] : memref<4x128xf32, #tpu.memory_space<vmem>>, vector<4x128xf32>
    %c0_1 = arith.constant 0 : index
    %c0_2 = arith.constant 0 : index
    %1 = memref.load %arg1[%c0_1, %c0_2] : memref<4x4xf32, #tpu.memory_space<smem>>
    %2 = vector.extract_strided_slice %0 {offsets = [0, 0], sizes = [1, 128], strides = [1, 1]} : vector<4x128xf32> to vector<1x128xf32>
    %3 = vector.broadcast %1 : f32 to vector<1x128xf32>
    %4 = arith.mulf %3, %2 : vector<1x128xf32>
    %c0_3 = arith.constant 0 : index
    %c1 = arith.constant 1 : index
    %5 = memref.load %arg1[%c0_3, %c1] : memref<4x4xf32, #tpu.memory_space<smem>>
    %6 = vector.extract_strided_slice %0 {offsets = [1, 0], sizes = [1, 128], strides = [1, 1]} : vector<4x128xf32> to vector<1x128xf32>
    %7 = vector.broadcast %5 : f32 to vector<1x128xf32>
    %8 = arith.mulf %7, %6 : vector<1x128xf32>
    %9 = arith.addf %4, %8 : vector<1x128xf32>
    %c0_4 = arith.constant 0 : index
    %c2 = arith.constant 2 : index
    %10 = memref.load %arg1[%c0_4, %c2] : memref<4x4xf32, #tpu.memory_space<smem>>
    %11 = vector.extract_strided_slice %0 {offsets = [2, 0], sizes = [1, 128], strides = [1, 1]} : vector<4x128xf32> to vector<1x128xf32>
    %12 = vector.broadcast %10 : f32 to vector<1x128xf32>
    %13 = arith.mulf %12, %11 : vector<1x128xf32>
    %14 = arith.addf %9, %13 : vector<1x128xf32>
    %c0_5 = arith.constant 0 : index
    %c3 = arith.constant 3 : index
    %15 = memref.load %arg1[%c0_5, %c3] : memref<4x4xf32, #tpu.memory_space<smem>>
    %16 = vector.extract_strided_slice %0 {offsets = [3, 0], sizes = [1, 128], strides = [1, 1]} : vector<4x128xf32> to vector<1x128xf32>
    %17 = vector.broadcast %15 : f32 to vector<1x128xf32>
    %18 = arith.mulf %17, %16 : vector<1x128xf32>
    %19 = arith.addf %14, %18 : vector<1x128xf32>
    %c1_6 = arith.constant 1 : index
    %c0_7 = arith.constant 0 : index
    %20 = memref.load %arg1[%c1_6, %c0_7] : memref<4x4xf32, #tpu.memory_space<smem>>
    %21 = vector.extract_strided_slice %0 {offsets = [0, 0], sizes = [1, 128], strides = [1, 1]} : vector<4x128xf32> to vector<1x128xf32>
    %22 = vector.broadcast %20 : f32 to vector<1x128xf32>
    %23 = arith.mulf %22, %21 : vector<1x128xf32>
    %c1_8 = arith.constant 1 : index
    %c1_9 = arith.constant 1 : index
    %24 = memref.load %arg1[%c1_8, %c1_9] : memref<4x4xf32, #tpu.memory_space<smem>>
    %25 = vector.extract_strided_slice %0 {offsets = [1, 0], sizes = [1, 128], strides = [1, 1]} : vector<4x128xf32> to vector<1x128xf32>
    %26 = vector.broadcast %24 : f32 to vector<1x128xf32>
    %27 = arith.mulf %26, %25 : vector<1x128xf32>
    %28 = arith.addf %23, %27 : vector<1x128xf32>
    %c1_10 = arith.constant 1 : index
    %c2_11 = arith.constant 2 : index
    %29 = memref.load %arg1[%c1_10, %c2_11] : memref<4x4xf32, #tpu.memory_space<smem>>
    %30 = vector.extract_strided_slice %0 {offsets = [2, 0], sizes = [1, 128], strides = [1, 1]} : vector<4x128xf32> to vector<1x128xf32>
    %31 = vector.broadcast %29 : f32 to vector<1x128xf32>
    %32 = arith.mulf %31, %30 : vector<1x128xf32>
    %33 = arith.addf %28, %32 : vector<1x128xf32>
    %c1_12 = arith.constant 1 : index
    %c3_13 = arith.constant 3 : index
    %34 = memref.load %arg1[%c1_12, %c3_13] : memref<4x4xf32, #tpu.memory_space<smem>>
    %35 = vector.extract_strided_slice %0 {offsets = [3, 0], sizes = [1, 128], strides = [1, 1]} : vector<4x128xf32> to vector<1x128xf32>
    %36 = vector.broadcast %34 : f32 to vector<1x128xf32>
    %37 = arith.mulf %36, %35 : vector<1x128xf32>
    %38 = arith.addf %33, %37 : vector<1x128xf32>
    %c2_14 = arith.constant 2 : index
    %c0_15 = arith.constant 0 : index
    %39 = memref.load %arg1[%c2_14, %c0_15] : memref<4x4xf32, #tpu.memory_space<smem>>
    %40 = vector.extract_strided_slice %0 {offsets = [0, 0], sizes = [1, 128], strides = [1, 1]} : vector<4x128xf32> to vector<1x128xf32>
    %41 = vector.broadcast %39 : f32 to vector<1x128xf32>
    %42 = arith.mulf %41, %40 : vector<1x128xf32>
    %c2_16 = arith.constant 2 : index
    %c1_17 = arith.constant 1 : index
    %43 = memref.load %arg1[%c2_16, %c1_17] : memref<4x4xf32, #tpu.memory_space<smem>>
    %44 = vector.extract_strided_slice %0 {offsets = [1, 0], sizes = [1, 128], strides = [1, 1]} : vector<4x128xf32> to vector<1x128xf32>
    %45 = vector.broadcast %43 : f32 to vector<1x128xf32>
    %46 = arith.mulf %45, %44 : vector<1x128xf32>
    %47 = arith.addf %42, %46 : vector<1x128xf32>
    %c2_18 = arith.constant 2 : index
    %c2_19 = arith.constant 2 : index
    %48 = memref.load %arg1[%c2_18, %c2_19] : memref<4x4xf32, #tpu.memory_space<smem>>
    %49 = vector.extract_strided_slice %0 {offsets = [2, 0], sizes = [1, 128], strides = [1, 1]} : vector<4x128xf32> to vector<1x128xf32>
    %50 = vector.broadcast %48 : f32 to vector<1x128xf32>
    %51 = arith.mulf %50, %49 : vector<1x128xf32>
    %52 = arith.addf %47, %51 : vector<1x128xf32>
    %c2_20 = arith.constant 2 : index
    %c3_21 = arith.constant 3 : index
    %53 = memref.load %arg1[%c2_20, %c3_21] : memref<4x4xf32, #tpu.memory_space<smem>>
    %54 = vector.extract_strided_slice %0 {offsets = [3, 0], sizes = [1, 128], strides = [1, 1]} : vector<4x128xf32> to vector<1x128xf32>
    %55 = vector.broadcast %53 : f32 to vector<1x128xf32>
    %56 = arith.mulf %55, %54 : vector<1x128xf32>
    %57 = arith.addf %52, %56 : vector<1x128xf32>
    %c3_22 = arith.constant 3 : index
    %c0_23 = arith.constant 0 : index
    %58 = memref.load %arg1[%c3_22, %c0_23] : memref<4x4xf32, #tpu.memory_space<smem>>
    %59 = vector.extract_strided_slice %0 {offsets = [0, 0], sizes = [1, 128], strides = [1, 1]} : vector<4x128xf32> to vector<1x128xf32>
    %60 = vector.broadcast %58 : f32 to vector<1x128xf32>
    %61 = arith.mulf %60, %59 : vector<1x128xf32>
    %c3_24 = arith.constant 3 : index
    %c1_25 = arith.constant 1 : index
    %62 = memref.load %arg1[%c3_24, %c1_25] : memref<4x4xf32, #tpu.memory_space<smem>>
    %63 = vector.extract_strided_slice %0 {offsets = [1, 0], sizes = [1, 128], strides = [1, 1]} : vector<4x128xf32> to vector<1x128xf32>
    %64 = vector.broadcast %62 : f32 to vector<1x128xf32>
    %65 = arith.mulf %64, %63 : vector<1x128xf32>
    %66 = arith.addf %61, %65 : vector<1x128xf32>
    %c3_26 = arith.constant 3 : index
    %c2_27 = arith.constant 2 : index
    %67 = memref.load %arg1[%c3_26, %c2_27] : memref<4x4xf32, #tpu.memory_space<smem>>
    %68 = vector.extract_strided_slice %0 {offsets = [2, 0], sizes = [1, 128], strides = [1, 1]} : vector<4x128xf32> to vector<1x128xf32>
    %69 = vector.broadcast %67 : f32 to vector<1x128xf32>
    %70 = arith.mulf %69, %68 : vector<1x128xf32>
    %71 = arith.addf %66, %70 : vector<1x128xf32>
    %c3_28 = arith.constant 3 : index
    %c3_29 = arith.constant 3 : index
    %72 = memref.load %arg1[%c3_28, %c3_29] : memref<4x4xf32, #tpu.memory_space<smem>>
    %73 = vector.extract_strided_slice %0 {offsets = [3, 0], sizes = [1, 128], strides = [1, 1]} : vector<4x128xf32> to vector<1x128xf32>
    %74 = vector.broadcast %72 : f32 to vector<1x128xf32>
    %75 = arith.mulf %74, %73 : vector<1x128xf32>
    %76 = arith.addf %71, %75 : vector<1x128xf32>
    %77 = tpu.concatenate %19, %38, %57, %76 in 0 : vector<1x128xf32>, vector<1x128xf32>, vector<1x128xf32>, vector<1x128xf32> -> vector<4x128xf32>
    %c0_30 = arith.constant 0 : index
    %c0_31 = arith.constant 0 : index
    %78 = vector.load %arg3[%c0_30, %c0_31] : memref<4x128xf32, #tpu.memory_space<vmem>>, vector<4x128xf32>
    tpu.vector_store %arg3[%c0_30, %c0_31], %77 {strides = array<i32>} : memref<4x128xf32, #tpu.memory_space<vmem>>, vector<4x128xf32>,
    return
  }
  func.func @transform_0(%arg0: i32) -> (i32, i32) {
    %c0_i32 = arith.constant 0 : i32
    %c0_i32_0 = arith.constant 0 : i32
    %c0_i32_1 = arith.constant 0 : i32
    return %c0_i32, %c0_i32_0 : i32, i32
  }
  func.func @transform_1(%arg0: i32) -> (i32, i32) {
    %c0_i32 = arith.constant 0 : i32
    %c0_i32_0 = arith.constant 0 : i32
    return %c0_i32, %arg0 : i32, i32
  }
  func.func @transform_2(%arg0: i32) -> (i32, i32) {
    %c0_i32 = arith.constant 0 : i32
    %c0_i32_0 = arith.constant 0 : i32
    return %c0_i32, %arg0 : i32, i32
  }
}

</mosaic_0001>

<llo_original>
// kernel: tpu_custom_call.1
$region0: #{tpu_custom_call.1}
  #allocation0 [shape = 'u32[]', space=smem, size = 0x4, offset = 0x4, fixed_abs, tag = 'smem constant byte address 0x4 - core index']
  #allocation1 [shape = 'u32[144,128]{1,0:T(1,128)}', space=vmem, size = 0x12000, scoped, tag = 'internal scratch']
  %s0 = inlined_call_operand.hbm [shape: f32[4,4], index: 0, kind: input, shape index: {}]
  %s1 = inlined_call_operand.hbm [shape: f32[4,256], index: 1, kind: input, shape index: {}]
  %s2 = inlined_call_operand.hbm [shape: f32[4,256], index: 2, kind: output, shape index: {}]
  %s3 = sld [smem:[#allocation0]]
  $region49: #{tpu_custom_call.1} parent=0
    _
  %s5 = ssub.s32 1, %s3
  %s6 = scalar_select 0, %s5, %s3
  $region1: #{tpu_custom_call.1} parent=0
    #allocation2 [shape = 'u8[2048]{0}', space=smem, size = 0x800, scoped, tag = 'input window, operand 0, single buffered']
    #allocation3 [shape = 's32[2]{0}', space=sflag, size = 0x8, scoped, tag = 'scoped memory for tpu_custom_call.1']
    #allocation4 [shape = 's32[2]{0}', space=sflag, size = 0x8, scoped, tag = 'scoped memory for tpu_custom_call.1']
    #allocation5 [shape = 's32[2]{0}', space=sflag, size = 0x8, scoped, tag = 'scoped memory for tpu_custom_call.1']
    #allocation6 [shape = 'u8[4096]{0}', space=vmem, size = 0x1000, scoped, tag = 'input window, operand 1']
    #allocation7 [shape = 'u8[4096]{0}', space=vmem, size = 0x1000, scoped, tag = 'output window, operand 0']
    %7 = vsyncpa [#allocation5], 0
    %8 = vsyncpa [#allocation3], 0
    %s9 = scalar_lea.sflag [#allocation3], 1
    %10 = vsyncpa %s9, 0
    %11 = vsyncpa [#allocation4], 0
    %s12 = scalar_lea.sflag [#allocation4], 1
    %13 = vsyncpa %s12, 0
    loop: start=0, step=1, limit=4
    $region2: #{tpu_custom_call.1} parent=1 // loop_pre_header
      _
    $region3: #{tpu_custom_call.1} parent=1 // loop_header
      %s15 = sphi 0, %s19
      %p16 = scmp.ge.s32.totalorder %s15, 4
      %s23 = sphi 0, %s23
      %s25 = sphi 0, %s23
      %s26 = sphi 0, %s25
      %s40 = sphi 0, %s26
      %s46 = sphi 0, %s48
      %s49 = sphi 0, %s46
      %s50 = sphi 0, %s49
      %s66 = sphi 0, %s50
      %s72 = sphi 0, %s74
      %s75 = sphi 0, %s72
      %s76 = sphi 0, %s75
      %s92 = sphi 0, %s76
    $region4: #{tpu_custom_call.1} parent=1 // loop_header_branch
      %18 = sbr.rel (%p16) target = $region8
    $region5: #{tpu_custom_call.1} parent=1 // loop_body
      %s20 = ssub.s32 %s15, 1
      %s21 = ssub.s32 %s15, 2
      %s22 = sadd.s32 %s15, 1
      %s24 = sadd.s32 %s23, 1
      %p27 = scmp.eq.s32.totalorder %s15, 1
      %p28 = scmp.ne.s32.totalorder %s23, %s25
      %p29 = scmp.eq.s32.totalorder %s15, 0
      %p30 = por %p28, %p29
      %p31 = scmp.ne.s32.totalorder %s23, %s25
      %p32 = scmp.eq.s32.totalorder %s20, 1
      %p33 = por %p31, %p32
      %p34 = scmp.ne.s32.totalorder %s25, %s26
      %p35 = scmp.eq.s32.totalorder %s20, 0
      %p36 = por %p34, %p35
      %p37 = scmp.ne.s32.totalorder %s25, %s26
      %p38 = scmp.eq.s32.totalorder %s21, 1
      %p39 = por %p37, %p38
      %p41 = scmp.ne.s32.totalorder %s26, %s40
      %p42 = scmp.eq.s32.totalorder %s21, 0
      %p43 = por %p41, %p42
      %s44 = ssub.s32 %s15, %s22
      %p45 = scmp.eq.s32.totalorder %s44, 0
      %s47 = sadd.s32 %s46, 1
      %s48 = scalar_select %p45, %s46, %s47
      %p51 = pneg %p45
      %p52 = scmp.eq.s32.totalorder %s15, 1
      %p53 = por %p51, %p52
      %p54 = scmp.ne.s32.totalorder %s46, %s49
      %p55 = scmp.eq.s32.totalorder %s15, 0
      %p56 = por %p54, %p55
      %p57 = scmp.ne.s32.totalorder %s46, %s49
      %p58 = scmp.eq.s32.totalorder %s20, 1
      %p59 = por %p57, %p58
      %p60 = scmp.ne.s32.totalorder %s49, %s50
      %p61 = scmp.eq.s32.totalorder %s20, 0
      %p62 = por %p60, %p61
      %p63 = scmp.ne.s32.totalorder %s49, %s50
      %p64 = scmp.eq.s32.totalorder %s21, 1
      %p65 = por %p63, %p64
      %p67 = scmp.ne.s32.totalorder %s50, %s66
      %p68 = scmp.eq.s32.totalorder %s21, 0
      %p69 = por %p67, %p68
      %s70 = ssub.s32 %s15, %s22
      %p71 = scmp.eq.s32.totalorder %s70, 0
      %s73 = sadd.s32 %s72, 1
      %s74 = scalar_select %p71, %s72, %s73
      %p77 = pneg %p71
      %p78 = scmp.eq.s32.totalorder %s15, 1
      %p79 = por %p77, %p78
      %p80 = scmp.ne.s32.totalorder %s72, %s75
      %p81 = scmp.eq.s32.totalorder %s15, 0
      %p82 = por %p80, %p81
      %p83 = scmp.ne.s32.totalorder %s72, %s75
      %p84 = scmp.eq.s32.totalorder %s20, 1
      %p85 = por %p83, %p84
      %p86 = scmp.ne.s32.totalorder %s75, %s76
      %p87 = scmp.eq.s32.totalorder %s20, 0
      %p88 = por %p86, %p87
      %p89 = scmp.ne.s32.totalorder %s75, %s76
      %p90 = scmp.eq.s32.totalorder %s21, 1
      %p91 = por %p89, %p90
      %p93 = scmp.ne.s32.totalorder %s76, %s92
      %p94 = scmp.eq.s32.totalorder %s21, 0
      %p95 = por %p93, %p94
      %p96 = scmp.le.s32.totalorder 1, %s15
      %p97 = scmp.lt.s32.totalorder %s15, 3
      %p98 = pnand %p96, %p97
      %p99 = pneg %p98
      // Predicated region
      $region9: #{tpu_custom_call.1} parent=5 // pred_check
        _
      $region10: #{tpu_custom_call.1} parent=5 // pred_check_branch
        %101 = sbr.rel (%p98) target = $region12
      $region11: #{tpu_custom_call.1} parent=5 // pred_region
        %s102 = ssub.s32 %s15, 1
        // Predicated region
        $region13: #{tpu_custom_call.1} parent=11 // pred_check
          %p103 = pneg %p36
        $region14: #{tpu_custom_call.1} parent=11 // pred_check_branch
          %105 = sbr.rel (%p103) target = $region16
        $region15: #{tpu_custom_call.1} parent=11 // pred_region
          %s107 = ssub.s32 64, 64
          %108 = vsyncadd [#allocation5], %s107
          %111 = dma.hbm_to_smem %s0, 64, [#allocation2], [#allocation5]
        $region16: #{tpu_custom_call.1} parent=11 // pred_fallthru
          _
      $region12: #{tpu_custom_call.1} parent=5 // pred_fallthru
        _
      %p112 = scmp.lt.s32.totalorder %s15, 2
      // Predicated region
      $region17: #{tpu_custom_call.1} parent=5 // pred_check
        %p113 = pneg %p112
      $region18: #{tpu_custom_call.1} parent=5 // pred_check_branch
        %115 = sbr.rel (%p113) target = $region20
      $region19: #{tpu_custom_call.1} parent=5 // pred_region
        // Predicated region
        $region21: #{tpu_custom_call.1} parent=19 // pred_check
          %p116 = pneg %p56
        $region22: #{tpu_custom_call.1} parent=19 // pred_check_branch
          %118 = sbr.rel (%p116) target = $region24
        $region23: #{tpu_custom_call.1} parent=19 // pred_region
          %s119 = sand.u32 %s46, 1
          %s120 = scalar_lea.sflag [#allocation3], %s119
          %s121 = sand.u32 %s46, 1
          %s122 = smul.addr %s121, 4
          %s123 = scalar_lea.vmem [#allocation6], %s122
          %s125 = ssub.s32 64, 64
          %126 = vsyncadd %s120, %s125
          %s127 = smul.addr %s15, 64
          %s128 = scalar_lea.hbm %s1, %s127
          %s130 = sshll.u32 %s123, 4
          %s131 = int_to_ptr.vmem [resolvable:$true] %s130
          %133 = dma.hbm_to_vmem [thread:$0]  %s128, 64, %s131, %s120
        $region24: #{tpu_custom_call.1} parent=19 // pred_fallthru
          _
      $region20: #{tpu_custom_call.1} parent=5 // pred_fallthru
        _
      %p134 = scmp.le.s32.totalorder 1, %s15
      %p135 = scmp.lt.s32.totalorder %s15, 3
      %p136 = pnand %p134, %p135
      %p137 = pneg %p136
      // Predicated region
      $region25: #{tpu_custom_call.1} parent=5 // pred_check
        _
      $region26: #{tpu_custom_call.1} parent=5 // pred_check_branch
        %139 = sbr.rel (%p136) target = $region28
      $region27: #{tpu_custom_call.1} parent=5 // pred_region
        %s140 = ssub.s32 %s15, 1
        // Predicated region
        $region29: #{tpu_custom_call.1} parent=27 // pred_check
          %p141 = pneg %p36
        $region30: #{tpu_custom_call.1} parent=27 // pred_check_branch
          %143 = sbr.rel (%p141) target = $region32
        $region31: #{tpu_custom_call.1} parent=27 // pred_region
          %144 = dma.done [#allocation5], 64
        $region32: #{tpu_custom_call.1} parent=27 // pred_fallthru
          _
        %s145 = sand.u32 %s49, 1
        %s146 = scalar_lea.sflag [#allocation3], %s145
        %s147 = sand.u32 %s49, 1
        %s148 = smul.addr %s147, 4
        %s149 = scalar_lea.vmem [#allocation6], %s148
        // Predicated region
        $region33: #{tpu_custom_call.1} parent=27 // pred_check
          %p150 = pneg %p62
        $region34: #{tpu_custom_call.1} parent=27 // pred_check_branch
          %152 = sbr.rel (%p150) target = $region36
        $region35: #{tpu_custom_call.1} parent=27 // pred_region
          %153 = dma.done %s146, 64
        $region36: #{tpu_custom_call.1} parent=27 // pred_fallthru
          _
        %154 = sfence
        %p155 = pneg %p36
        %p156 = pneg %p33
        %s157 = sand.u32 %s49, 1
        %s158 = scalar_lea.sflag [#allocation3], %s157
        %s159 = sand.u32 %s49, 1
        %s160 = smul.addr %s159, 4
        %s161 = scalar_lea.vmem [#allocation6], %s160
        %p162 = pneg %p62
        %p163 = pneg %p59
        %p164 = pneg %p88
        %p165 = pneg %p85
        %s166 = sand.u32 %s75, 1
        %s167 = scalar_lea.sflag [#allocation4], %s166
        %s168 = sand.u32 %s75, 1
        %s169 = smul.addr %s168, 4
        %s170 = scalar_lea.vmem [#allocation7], %s169
        %v171 = vld [vmem:[%s149] sm:$0xf]
        %s172 = sld [smem:[#allocation2]]
        %v173 = vstv %s172
        %v174 = vmul.f32 %v173, %v171
        %s175 = sld [smem:[#allocation2 + $0x1]]
        %v176 = vstv %s175
        %v177 = vmul.f32 %v176, %v171
        %v179 = vrot.slane %v177, 1
        %v181 = vadd.f32 %v174, %v179
        %s182 = sld [smem:[#allocation2 + $0x2]]
        %v183 = vstv %s182
        %v184 = vmul.f32 %v183, %v171
        %v186 = vrot.slane %v184, 2
        %v188 = vadd.f32 %v181, %v186
        %s189 = sld [smem:[#allocation2 + $0x3]]
        %v190 = vstv %s189
        %v191 = vmul.f32 %v190, %v171
        %v193 = vrot.slane %v191, 3
        %v195 = vadd.f32 %v188, %v193
        %s196 = sld [smem:[#allocation2 + $0x80]]
        %v197 = vstv %s196
        %v198 = vmul.f32 %v197, %v171
        %s199 = sld [smem:[#allocation2 + $0x81]]
        %v200 = vstv %s199
        %v201 = vmul.f32 %v200, %v171
        %v203 = vrot.slane %v201, 1
        %v205 = vadd.f32 %v198, %v203
        %s206 = sld [smem:[#allocation2 + $0x82]]
        %v207 = vstv %s206
        %v208 = vmul.f32 %v207, %v171
        %v210 = vrot.slane %v208, 2
        %v212 = vadd.f32 %v205, %v210
        %s213 = sld [smem:[#allocation2 + $0x83]]
        %v214 = vstv %s213
        %v215 = vmul.f32 %v214, %v171
        %v217 = vrot.slane %v215, 3
        %v219 = vadd.f32 %v212, %v217
        %s220 = sld [smem:[#allocation2 + $0x100]]
        %v221 = vstv %s220
        %v222 = vmul.f32 %v221, %v171
        %s223 = sld [smem:[#allocation2 + $0x101]]
        %v224 = vstv %s223
        %v225 = vmul.f32 %v224, %v171
        %v227 = vrot.slane %v225, 1
        %v229 = vadd.f32 %v222, %v227
        %s230 = sld [smem:[#allocation2 + $0x102]]
        %v231 = vstv %s230
        %v232 = vmul.f32 %v231, %v171
        %v234 = vrot.slane %v232, 2
        %v236 = vadd.f32 %v229, %v234
        %s237 = sld [smem:[#allocation2 + $0x103]]
        %v238 = vstv %s237
        %v239 = vmul.f32 %v238, %v171
        %v241 = vrot.slane %v239, 3
        %v243 = vadd.f32 %v236, %v241
        %s244 = sld [smem:[#allocation2 + $0x180]]
        %v245 = vstv %s244
        %v246 = vmul.f32 %v245, %v171
        %s247 = sld [smem:[#allocation2 + $0x181]]
        %v248 = vstv %s247
        %v249 = vmul.f32 %v248, %v171
        %v251 = vrot.slane %v249, 1
        %v253 = vadd.f32 %v246, %v251
        %s254 = sld [smem:[#allocation2 + $0x182]]
        %v255 = vstv %s254
        %v256 = vmul.f32 %v255, %v171
        %v258 = vrot.slane %v256, 2
        %v260 = vadd.f32 %v253, %v258
        %s261 = sld [smem:[#allocation2 + $0x183]]
        %v262 = vstv %s261
        %v263 = vmul.f32 %v262, %v171
        %v265 = vrot.slane %v263, 3
        %v267 = vadd.f32 %v260, %v265
        %v269 = vrot.slane %v219, 7
        %v272 = vrot.slane %v243, 6
        %v275 = vrot.slane %v267, 5
        %vm277 = vcmask 1040384
        %v278 = vsel %vm277, %v195, %v269
        %vm279 = vcmask 1041408
        %v280 = vsel %vm279, %v278, %v272
        %vm281 = vcmask 1042432
        %v282 = vsel %vm281, %v280, %v275
        %283 = vst [vmem:[%s170] sm:$0xf] %v282
        %s284 = sand.u32 %s75, 1
        %s285 = scalar_lea.sflag [#allocation4], %s284
        %s286 = sand.u32 %s75, 1
        %s287 = smul.addr %s286, 4
        %s288 = scalar_lea.vmem [#allocation7], %s287
        // Predicated region
        $region37: #{tpu_custom_call.1} parent=27 // pred_check
          %p289 = pneg %p85
        $region38: #{tpu_custom_call.1} parent=27 // pred_check_branch
          %291 = sbr.rel (%p289) target = $region40
        $region39: #{tpu_custom_call.1} parent=27 // pred_region
          %s293 = ssub.s32 64, 64
          %294 = vsyncadd %s285, %s293
          %s295 = smul.addr %s20, 64
          %s296 = scalar_lea.hbm %s2, %s295
          %s298 = sshll.u32 %s288, 4
          %s299 = int_to_ptr.vmem [resolvable:$true] %s298
          %301 = dma.vmem_to_hbm [thread:$0]  %s299, 64, %s296, %s285
        $region40: #{tpu_custom_call.1} parent=27 // pred_fallthru
          _
      $region28: #{tpu_custom_call.1} parent=5 // pred_fallthru
        _
      %p302 = scmp.le.s32.totalorder 2, %s15
      // Predicated region
      $region41: #{tpu_custom_call.1} parent=5 // pred_check
        %p303 = pneg %p302
      $region42: #{tpu_custom_call.1} parent=5 // pred_check_branch
        %305 = sbr.rel (%p303) target = $region44
      $region43: #{tpu_custom_call.1} parent=5 // pred_region
        %s306 = ssub.s32 %s15, 2
        // Predicated region
        $region45: #{tpu_custom_call.1} parent=43 // pred_check
          %p307 = pneg %p91
        $region46: #{tpu_custom_call.1} parent=43 // pred_check_branch
          %309 = sbr.rel (%p307) target = $region48
        $region47: #{tpu_custom_call.1} parent=43 // pred_region
          %s310 = sand.u32 %s76, 1
          %s311 = scalar_lea.sflag [#allocation4], %s310
          %s312 = sand.u32 %s76, 1
          %s313 = smul.addr %s312, 4
          %s314 = scalar_lea.vmem [#allocation7], %s313
          %315 = dma.done %s311, 64
        $region48: #{tpu_custom_call.1} parent=43 // pred_fallthru
          _
      $region44: #{tpu_custom_call.1} parent=5 // pred_fallthru
        _
    $region6: #{tpu_custom_call.1} parent=1 // loop_footer
      %s19 = sadd.s32 1, %s15
    $region7: #{tpu_custom_call.1} parent=1 // loop_footer_branch
      %14 = sbr.rel target = $region3
    $region8: #{tpu_custom_call.1} parent=1 // loop_exit
      _
    %316 = vsyncpa [#allocation3], 1
    %s317 = scalar_lea.sflag [#allocation3], 1
    %318 = vsyncpa %s317, 1
    %319 = vsyncpa [#allocation4], 1
    %s320 = scalar_lea.sflag [#allocation4], 1
    %321 = vsyncpa %s320, 1
    %322 = vsyncpa [#allocation5], 1
    %s323 = scalar_lea.sflag [#allocation5], 1
    %324 = vsyncpa %s323, 1

</llo_original>
